<compile_context>
chip_gen: v6e
topology: v6e:2x2x1
jax: 0.10.0
libtpu: 0.0.40
codegen_flags: <defaults>
</compile_context>

<pallas_src>
import functools

import numpy as np
import jax
import jax.numpy as jnp
from jax import lax
from jax.experimental import pallas as pl
from jax.experimental.pallas import tpu as pltpu

# Model constants (from AudioCNN.__init__)
K = 5          # conv kernel size
PAD = 2        # conv padding
C1 = 16        # conv1 out channels
C2 = 32        # conv2 out channels
NCLS = 5       # fc out features
POOL = 4       # max-pool window / stride

# Kernel layout constants
G1 = 8                    # conv1 output positions packed per matmul row
W1_ROWS = G1 + K - 1      # = 12 : compact raw-sample window per row
LANE = 128                # TPU lane width


def _pack_conv1_weight(w1):
    """w1 (C1,1,K) -> (12, 128) block weight.

    LHS lane m of a row holds raw sample x[8u + m - PAD]; output lane g*C1 + c is
    conv1 output at position 8u + g, channel c:
        W[m, g*C1 + c] = w1[c, 0, m - g]  if 0 <= m - g < K else 0.
    """
    sel = np.zeros((W1_ROWS, G1, K), np.float32)
    for m in range(W1_ROWS):
        for g in range(G1):
            k = m - g
            if 0 <= k < K:
                sel[m, g, k] = 1.0
    w1k = w1[:, 0, :].astype(jnp.float32)                      # (C1, K)
    w1p = jnp.einsum('mgk,ck->mgc', jnp.asarray(sel), w1k)     # (12, 8, 16)
    return w1p.reshape(W1_ROWS, G1 * C1).astype(jnp.bfloat16)


def _pack_conv2_weight(w2):
    """w2 (C2,C1,K) -> (96, 64) pair-packed block weight.

    LHS lane w*2*C1 + q*C1 + c holds pooled position 2u + 2(w-1) + q, channel c;
    output lane g*C2 + d is conv2 output at pooled position 2u + g, channel d:
        W[w*32 + q*16 + c, g*32 + d] = w2[d, c, 2w + q - g]  if 0 <= 2w+q-g < K.
    """
    sel = np.zeros((3, 2, 2, K), np.float32)        # (w, q, g, k)
    for wblk in range(3):
        for q in range(2):
            for g in range(2):
                k = 2 * wblk + q - g
                if 0 <= k < K:
                    sel[wblk, q, g, k] = 1.0
    w2p = jnp.einsum('wqgk,dck->wqcgd', jnp.asarray(sel), w2.astype(jnp.float32))
    return w2p.reshape(3 * 2 * C1, 2 * C2).astype(jnp.bfloat16)


def audiocnn_kernel(x_ref, w1_ref, w2_ref, wfc_ref, b_ref, out_ref, *, bt, hp, lp):
    """One grid step = one batch tile of `bt` clips.

    Row structure: each of the R = bt*hp rows carries G1=8 consecutive raw
    samples of one clip -> 8 conv1 outputs -> 2 max-pooled positions -> 2 conv2
    outputs (hp = L // 8 rows per clip).
    """
    R = bt * hp

    # Row index within its clip; used to zero the halo rows at clip boundaries
    # (these are exactly the zero-padding positions of both convolutions).
    u = lax.broadcasted_iota(jnp.int32, (R, 2 * C1), 0) % hp
    first = u == 0                 # (R, 32)
    last = u == hp - 1             # (R, 32)
    first2 = u[:, :PAD] == 0       # (R, 2)
    last2 = u[:, :PAD] == hp - 1   # (R, 2)

    # ---- conv1: block-packed matmul, 128 output lanes (8 positions x 16 ch) ----
    x = x_ref[...].astype(jnp.float32)                         # (R, 8)
    # halo: last/first 2 raw samples of the neighbouring rows (roll by R-1 == -1).
    prev = jnp.where(first2, 0.0, pltpu.roll(x, 1, 0)[:, G1 - PAD:G1])
    nxt = jnp.where(last2, 0.0, pltpu.roll(x, R - 1, 0)[:, :PAD])
    lhs1 = jnp.concatenate([prev, x, nxt], axis=-1).astype(jnp.bfloat16)   # (R, 12)
    h1 = jnp.dot(lhs1, w1_ref[...], preferred_element_type=jnp.float32)    # (R, 128)
    h1 = jnp.maximum(h1 + b_ref[0:1, :], 0.0)

    # ---- MaxPool1d(4): max over 4 adjacent position groups (lane slices) ----
    def pool4(y):   # (R, 4*C1) -> (R, C1)
        return jnp.maximum(jnp.maximum(y[:, 0:C1], y[:, C1:2 * C1]),
                           jnp.maximum(y[:, 2 * C1:3 * C1], y[:, 3 * C1:4 * C1]))

    pooled = jnp.concatenate([pool4(h1[:, :4 * C1]), pool4(h1[:, 4 * C1:])],
                             axis=-1)                          # (R, 32) f32

    # ---- conv2: pair-packed matmul, 64 output lanes (2 positions x 32 ch) ----
    prevp = jnp.where(first, 0.0, pltpu.roll(pooled, 1, 0))
    nextp = jnp.where(last, 0.0, pltpu.roll(pooled, R - 1, 0))
    lhs2 = jnp.concatenate([prevp, pooled, nextp],
                           axis=-1).astype(jnp.bfloat16)       # (R, 96)
    h2 = jnp.dot(lhs2, w2_ref[...], preferred_element_type=jnp.float32)    # (R, 64)
    h2 = jnp.maximum(h2 + b_ref[1:2, 0:2 * C2], 0.0)

    # ---- AdaptiveAvgPool1d(1): mean over all positions of each clip (f32) ----
    ssum = jnp.sum(h2.reshape(bt, hp, 2 * C2), axis=1)         # (bt, 64)
    feat = (ssum[:, 0:C2] + ssum[:, C2:2 * C2]) * (1.0 / lp)   # (bt, 32)

    # Dropout(p=0.3) is identity at inference time.
    # TODO(synk): training-mode stochastic dropout masking not implemented.

    # ---- fc: (bt, 32) @ (32, 128) + bias; lanes >= NCLS are zero padding ----
    out_ref[...] = (jnp.dot(feat, wfc_ref[...], preferred_element_type=jnp.float32)
                    + b_ref[2:3, :])


def _pick_batch_tile(B, L):
    """Batch tile size.

    * must divide B; tiles smaller than B are multiples of 8 (block-shape rule);
    * sized so the dominant lane-dense f32 intermediates (~3 slabs of
      (bt*L/8, 128)) stay well inside the scoped-VMEM budget on every
      generation (v7x has only 64 MiB physical);
    * leaves >= 2 grid steps when possible so v7x can shard the batch axis
      across its two TensorCores.
    """
    if B % 8 != 0 or B == 8:
        return B
    budget = 24 << 20
    per_sample = (L // 8) * LANE * 4 * 3
    cap = max(8, budget // max(per_sample, 1))
    bt = 8
    while B % (bt * 2) == 0 and bt * 2 <= cap and B // (bt * 2) >= 2:
        bt *= 2
    return bt


def audiocnn_forward(x_ncl, params):
    """x_ncl: (B, 1, L); params in PyTorch shapes:
       w1 (C1,1,K), b1 (C1,), w2 (C2,C1,K), b2 (C2,), wfc (NCLS,C2), bfc (NCLS,)."""
    w1, b1, w2, b2, wfc, bfc = params
    B, cin, L = x_ncl.shape
    assert cin == 1
    assert L % (2 * POOL) == 0, "L must be a multiple of 8"
    Lp = L // POOL
    Hp = L // (2 * POOL)        # rows per clip (2 pooled positions per row)

    # Raw input: pure reshape (no im2col inflation), bf16 to halve input DMA.
    xr = x_ncl[:, 0, :].astype(jnp.bfloat16).reshape(B * Hp, 2 * POOL)

    w1p = _pack_conv1_weight(w1)                               # (12, 128) bf16
    w2p = _pack_conv2_weight(w2)                               # (96, 64)  bf16
    wfcp = jnp.zeros((C2, LANE), jnp.float32).at[:, :NCLS].set(
        jnp.transpose(wfc).astype(jnp.float32))                # (32, 128) f32
    bpack = (jnp.zeros((3, LANE), jnp.float32)
             .at[0, :G1 * C1].set(jnp.tile(b1.astype(jnp.float32), G1))
             .at[1, :2 * C2].set(jnp.tile(b2.astype(jnp.float32), 2))
             .at[2, :NCLS].set(bfc.astype(jnp.float32)))       # (3, 128) f32

    bt = _pick_batch_tile(B, L)
    grid = (B // bt,)
    kernel = functools.partial(audiocnn_kernel, bt=bt, hp=Hp, lp=Lp)

    out = pl.pallas_call(
        kernel,
        out_shape=jax.ShapeDtypeStruct((B, LANE), jnp.float32),
        grid_spec=pltpu.PrefetchScalarGridSpec(
            num_scalar_prefetch=0,
            grid=grid,
            in_specs=[
                pl.BlockSpec((bt * Hp, 2 * POOL), lambda i: (i, 0)),   # raw input rows
                pl.BlockSpec((W1_ROWS, G1 * C1), lambda i: (0, 0)),    # packed conv1 W
                pl.BlockSpec((3 * 2 * C1, 2 * C2), lambda i: (0, 0)),  # packed conv2 W
                pl.BlockSpec((C2, LANE), lambda i: (0, 0)),            # padded fc W
                pl.BlockSpec((3, LANE), lambda i: (0, 0)),             # packed biases
            ],
            out_specs=pl.BlockSpec((bt, LANE), lambda i: (i, 0)),
        ),
        compiler_params=pltpu.CompilerParams(
            dimension_semantics=("parallel",),
            vmem_limit_bytes=48 * 1024 * 1024),
    )(xr, w1p, w2p, wfcp, bpack)

    # Lane-dense (B, 128) store from the kernel; only the first NCLS lanes are real.
    return out[:, :NCLS]


def reference_forward(x_ncl, params):
    """Pure-JAX f32 reference matching PyTorch semantics (eval mode)."""
    w1, b1, w2, b2, wfc, bfc = params
    y = lax.conv_general_dilated(
        x_ncl, w1, window_strides=(1,), padding=[(PAD, PAD)],
        dimension_numbers=("NCH", "OIH", "NCH"))
    y = jax.nn.relu(y + b1[None, :, None])
    B, C, L = y.shape
    y = jnp.max(y.reshape(B, C, L // POOL, POOL), axis=-1)      # MaxPool1d(4)
    y = lax.conv_general_dilated(
        y, w2, window_strides=(1,), padding=[(PAD, PAD)],
        dimension_numbers=("NCH", "OIH", "NCH"))
    y = jax.nn.relu(y + b2[None, :, None])
    y = jnp.mean(y, axis=-1)                                    # AdaptiveAvgPool1d(1)
    return y @ wfc.T + bfc[None, :]                             # Dropout = identity


if __name__ == "__main__":
    key = jax.random.PRNGKey(0)
    ks = jax.random.split(key, 7)
    B, L = 2, 64

    x = jax.random.normal(ks[0], (B, 1, L), jnp.float32)
    # Deterministic synthetic parameters (PyTorch shapes from AudioCNN.__init__).
    w1 = 0.2 * jax.random.normal(ks[1], (C1, 1, K), jnp.float32)
    b1 = 0.1 * jax.random.normal(ks[2], (C1,), jnp.float32)
    w2 = 0.1 * jax.random.normal(ks[3], (C2, C1, K), jnp.float32)
    b2 = 0.1 * jax.random.normal(ks[4], (C2,), jnp.float32)
    wfc = 0.1 * jax.random.normal(ks[5], (NCLS, C2), jnp.float32)
    bfc = 0.1 * jax.random.normal(ks[6], (NCLS,), jnp.float32)
    params = (w1, b1, w2, b2, wfc, bfc)

    out = jax.block_until_ready(audiocnn_forward(x, params))
    ref = jax.block_until_ready(reference_forward(x, params))

    assert out.shape == (B, NCLS), out.shape
    # bf16 MXU operands (f32 accumulation) vs a pure-f32 reference: use a
    # bf16-level tolerance.
    if not jnp.allclose(out, ref, atol=1e-2, rtol=1e-2):
        raise AssertionError(f"mismatch:\n{out}\nvs\n{ref}")
    print("KERNEL_OK")
</pallas_src>

<mosaic_0001>
module attributes {stable_mosaic.version = 11 : i64} {
  func.func @audiocnn_kernel(%arg0: i32, %arg1: memref<16x8xbf16, #tpu.memory_space<vmem>>, %arg2: memref<12x128xbf16, #tpu.memory_space<vmem>>, %arg3: memref<96x64xbf16, #tpu.memory_space<vmem>>, %arg4: memref<32x128xf32, #tpu.memory_space<vmem>>, %arg5: memref<3x128xf32, #tpu.memory_space<vmem>>, %arg6: memref<2x128xf32, #tpu.memory_space<vmem>>) attributes {dimension_semantics = [#tpu.dimension_semantics<parallel>], iteration_bounds = array<i64: 1>, scalar_prefetch = 0 : i64, scratch_operands = 0 : i64, tpu.core_type = #tpu.core_type<tc>, window_params = [{transform_indices = @transform_0, window_bounds = array<i64: 16, 8>}, {pipeline_mode = #tpu.pipeline_mode<synchronous>, transform_indices = @transform_1, window_bounds = array<i64: 12, 128>}, {pipeline_mode = #tpu.pipeline_mode<synchronous>, transform_indices = @transform_2, window_bounds = array<i64: 96, 64>}, {pipeline_mode = #tpu.pipeline_mode<synchronous>, transform_indices = @transform_3, window_bounds = array<i64: 32, 128>}, {pipeline_mode = #tpu.pipeline_mode<synchronous>, transform_indices = @transform_4, window_bounds = array<i64: 3, 128>}, {transform_indices = @transform_5, window_bounds = array<i64: 2, 128>}]} {
    %0 = tpu.iota {dimensions = array<i32: 0>} : vector<16x32xi32>
    %c8_i32 = arith.constant 8 : i32
    %c0_i32 = arith.constant 0 : i32
    %1 = arith.cmpi eq, %c8_i32, %c0_i32 : i32
    %c1_i32 = arith.constant 1 : i32
    %2 = arith.select %1, %c1_i32, %c8_i32 : i32
    %3 = vector.broadcast %2 : i32 to vector<16x32xi32>
    %4 = arith.remsi %0, %3 : vector<16x32xi32>
    %c0_i32_0 = arith.constant 0 : i32
    %5 = vector.broadcast %c0_i32_0 : i32 to vector<16x32xi32>
    %6 = arith.cmpi ne, %4, %5 : vector<16x32xi32>
    %c0_i32_1 = arith.constant 0 : i32
    %7 = vector.broadcast %c0_i32_1 : i32 to vector<16x32xi32>
    %8 = arith.cmpi slt, %4, %7 : vector<16x32xi32>
    %c0_i32_2 = arith.constant 0 : i32
    %9 = arith.cmpi slt, %2, %c0_i32_2 : i32
    %10 = vector.broadcast %9 : i1 to vector<16x32xi1>
    %11 = vector.broadcast %10 : vector<16x32xi1> to vector<16x32xi1>
    %12 = arith.xori %8, %11 : vector<16x32xi1>
    %13 = arith.andi %12, %6 : vector<16x32xi1>
    %14 = vector.broadcast %2 : i32 to vector<16x32xi32>
    %15 = arith.addi %4, %14 : vector<16x32xi32>
    %16 = arith.select %13, %15, %4 : vector<16x32xi1>, vector<16x32xi32>
    %c0_i32_3 = arith.constant 0 : i32
    %17 = vector.broadcast %c0_i32_3 : i32 to vector<16x32xi32>
    %18 = arith.cmpi eq, %16, %17 : vector<16x32xi32>
    %c7_i32 = arith.constant 7 : i32
    %19 = vector.broadcast %c7_i32 : i32 to vector<16x32xi32>
    %20 = arith.cmpi eq, %16, %19 : vector<16x32xi32>
    %21 = vector.extract_strided_slice %16 {offsets = [0, 0], sizes = [16, 2], strides = [1, 1]} : vector<16x32xi32> to vector<16x2xi32>
    %c0_i32_4 = arith.constant 0 : i32
    %22 = vector.broadcast %c0_i32_4 : i32 to vector<16x2xi32>
    %23 = arith.cmpi eq, %21, %22 : vector<16x2xi32>
    %24 = vector.extract_strided_slice %16 {offsets = [0, 0], sizes = [16, 2], strides = [1, 1]} : vector<16x32xi32> to vector<16x2xi32>
    %c7_i32_5 = arith.constant 7 : i32
    %25 = vector.broadcast %c7_i32_5 : i32 to vector<16x2xi32>
    %26 = arith.cmpi eq, %24, %25 : vector<16x2xi32>
    %c0 = arith.constant 0 : index
    %c0_6 = arith.constant 0 : index
    %27 = vector.load %arg1[%c0, %c0_6] : memref<16x8xbf16, #tpu.memory_space<vmem>>, vector<16x8xbf16>
    %28 = arith.extf %27 : vector<16x8xbf16> to vector<16x8xf32>
    %c1_i32_7 = arith.constant 1 : i32
    %29 = tpu.dynamic_rotate %28 by %c1_i32_7 dim 0 : vector<16x8xf32>, i32 -> vector<16x8xf32>
    %30 = vector.extract_strided_slice %29 {offsets = [0, 6], sizes = [16, 2], strides = [1, 1]} : vector<16x8xf32> to vector<16x2xf32>
    %cst = arith.constant 0.000000e+00 : f32
    %31 = vector.broadcast %cst : f32 to vector<16x2xf32>
    %32 = arith.select %23, %31, %30 : vector<16x2xi1>, vector<16x2xf32>
    %c15_i32 = arith.constant 15 : i32
    %33 = tpu.dynamic_rotate %28 by %c15_i32 dim 0 : vector<16x8xf32>, i32 -> vector<16x8xf32>
    %34 = vector.extract_strided_slice %33 {offsets = [0, 0], sizes = [16, 2], strides = [1, 1]} : vector<16x8xf32> to vector<16x2xf32>
    %cst_8 = arith.constant 0.000000e+00 : f32
    %35 = vector.broadcast %cst_8 : f32 to vector<16x2xf32>
    %36 = arith.select %26, %35, %34 : vector<16x2xi1>, vector<16x2xf32>
    %37 = tpu.concatenate %32, %28, %36 in 1 : vector<16x2xf32>, vector<16x8xf32>, vector<16x2xf32> -> vector<16x12xf32>
    %38 = arith.truncf %37 : vector<16x12xf32> to vector<16x12xbf16>
    %c0_9 = arith.constant 0 : index
    %c0_10 = arith.constant 0 : index
    %39 = vector.load %arg2[%c0_9, %c0_10] : memref<12x128xbf16, #tpu.memory_space<vmem>>, vector<12x128xbf16>
    %cst_11 = arith.constant dense<0.000000e+00> : vector<16x128xf32>
    %40 = tpu.matmul %38, %39, %cst_11 {dimension_numbers = #tpu.dot_dimension_numbers<[1], [0], [0], [1], [0, 0, 1, 1], [], []>} : vector<16x12xbf16>, vector<12x128xbf16>, vector<16x128xf32> -> vector<16x128xf32>
    %c0_12 = arith.constant 0 : index
    %c0_13 = arith.constant 0 : index
    %41 = vector.load %arg5[%c0_12, %c0_13] : memref<3x128xf32, #tpu.memory_space<vmem>>, vector<1x128xf32>
    %42 = vector.broadcast %41 : vector<1x128xf32> to vector<16x128xf32>
    %43 = arith.addf %40, %42 : vector<16x128xf32>
    %cst_14 = arith.constant 0.000000e+00 : f32
    %44 = vector.broadcast %cst_14 : f32 to vector<16x128xf32>
    %45 = arith.maximumf %43, %44 : vector<16x128xf32>
    %46 = vector.extract_strided_slice %45 {offsets = [0, 0], sizes = [16, 64], strides = [1, 1]} : vector<16x128xf32> to vector<16x64xf32>
    %47 = vector.extract_strided_slice %46 {offsets = [0, 0], sizes = [16, 16], strides = [1, 1]} : vector<16x64xf32> to vector<16x16xf32>
    %48 = vector.extract_strided_slice %46 {offsets = [0, 16], sizes = [16, 16], strides = [1, 1]} : vector<16x64xf32> to vector<16x16xf32>
    %49 = arith.maximumf %47, %48 : vector<16x16xf32>
    %50 = vector.extract_strided_slice %46 {offsets = [0, 32], sizes = [16, 16], strides = [1, 1]} : vector<16x64xf32> to vector<16x16xf32>
    %51 = vector.extract_strided_slice %46 {offsets = [0, 48], sizes = [16, 16], strides = [1, 1]} : vector<16x64xf32> to vector<16x16xf32>
    %52 = arith.maximumf %50, %51 : vector<16x16xf32>
    %53 = arith.maximumf %49, %52 : vector<16x16xf32>
    %54 = vector.extract_strided_slice %45 {offsets = [0, 64], sizes = [16, 64], strides = [1, 1]} : vector<16x128xf32> to vector<16x64xf32>
    %55 = vector.extract_strided_slice %54 {offsets = [0, 0], sizes = [16, 16], strides = [1, 1]} : vector<16x64xf32> to vector<16x16xf32>
    %56 = vector.extract_strided_slice %54 {offsets = [0, 16], sizes = [16, 16], strides = [1, 1]} : vector<16x64xf32> to vector<16x16xf32>
    %57 = arith.maximumf %55, %56 : vector<16x16xf32>
    %58 = vector.extract_strided_slice %54 {offsets = [0, 32], sizes = [16, 16], strides = [1, 1]} : vector<16x64xf32> to vector<16x16xf32>
    %59 = vector.extract_strided_slice %54 {offsets = [0, 48], sizes = [16, 16], strides = [1, 1]} : vector<16x64xf32> to vector<16x16xf32>
    %60 = arith.maximumf %58, %59 : vector<16x16xf32>
    %61 = arith.maximumf %57, %60 : vector<16x16xf32>
    %62 = tpu.concatenate %53, %61 in 1 : vector<16x16xf32>, vector<16x16xf32> -> vector<16x32xf32>
    %c1_i32_15 = arith.constant 1 : i32
    %63 = tpu.dynamic_rotate %62 by %c1_i32_15 dim 0 : vector<16x32xf32>, i32 -> vector<16x32xf32>
    %cst_16 = arith.constant 0.000000e+00 : f32
    %64 = vector.broadcast %cst_16 : f32 to vector<16x32xf32>
    %65 = arith.select %18, %64, %63 : vector<16x32xi1>, vector<16x32xf32>
    %c15_i32_17 = arith.constant 15 : i32
    %66 = tpu.dynamic_rotate %62 by %c15_i32_17 dim 0 : vector<16x32xf32>, i32 -> vector<16x32xf32>
    %cst_18 = arith.constant 0.000000e+00 : f32
    %67 = vector.broadcast %cst_18 : f32 to vector<16x32xf32>
    %68 = arith.select %20, %67, %66 : vector<16x32xi1>, vector<16x32xf32>
    %69 = tpu.concatenate %65, %62, %68 in 1 : vector<16x32xf32>, vector<16x32xf32>, vector<16x32xf32> -> vector<16x96xf32>
    %70 = arith.truncf %69 : vector<16x96xf32> to vector<16x96xbf16>
    %c0_19 = arith.constant 0 : index
    %c0_20 = arith.constant 0 : index
    %71 = vector.load %arg3[%c0_19, %c0_20] : memref<96x64xbf16, #tpu.memory_space<vmem>>, vector<96x64xbf16>
    %cst_21 = arith.constant dense<0.000000e+00> : vector<16x64xf32>
    %72 = tpu.matmul %70, %71, %cst_21 {dimension_numbers = #tpu.dot_dimension_numbers<[1], [0], [0], [1], [0, 0, 1, 1], [], []>} : vector<16x96xbf16>, vector<96x64xbf16>, vector<16x64xf32> -> vector<16x64xf32>
    %c1 = arith.constant 1 : index
    %c0_22 = arith.constant 0 : index
    %73 = vector.load %arg5[%c1, %c0_22] : memref<3x128xf32, #tpu.memory_space<vmem>>, vector<1x64xf32>
    %74 = vector.broadcast %73 : vector<1x64xf32> to vector<16x64xf32>
    %75 = arith.addf %72, %74 : vector<16x64xf32>
    %cst_23 = arith.constant 0.000000e+00 : f32
    %76 = vector.broadcast %cst_23 : f32 to vector<16x64xf32>
    %77 = arith.maximumf %75, %76 : vector<16x64xf32>
    %78 = vector.shape_cast %77 : vector<16x64xf32> to vector<2x8x64xf32>
    %cst_24 = arith.constant dense<0.000000e+00> : vector<2x64xf32>
    %79 = vector.multi_reduction <add>, %78, %cst_24 [1] : vector<2x8x64xf32> to vector<2x64xf32>
    %80 = vector.extract_strided_slice %79 {offsets = [0, 0], sizes = [2, 32], strides = [1, 1]} : vector<2x64xf32> to vector<2x32xf32>
    %81 = vector.extract_strided_slice %79 {offsets = [0, 32], sizes = [2, 32], strides = [1, 1]} : vector<2x64xf32> to vector<2x32xf32>
    %82 = arith.addf %80, %81 : vector<2x32xf32>
    %cst_25 = arith.constant 6.250000e-02 : f32
    %83 = vector.broadcast %cst_25 : f32 to vector<2x32xf32>
    %84 = arith.mulf %82, %83 : vector<2x32xf32>
    %c0_26 = arith.constant 0 : index
    %c0_27 = arith.constant 0 : index
    %85 = vector.load %arg4[%c0_26, %c0_27] : memref<32x128xf32, #tpu.memory_space<vmem>>, vector<32x128xf32>
    %cst_28 = arith.constant dense<0.000000e+00> : vector<2x128xf32>
    %86 = tpu.matmul %84, %85, %cst_28 {dimension_numbers = #tpu.dot_dimension_numbers<[1], [0], [0], [1], [0, 0, 1, 1], [], []>} : vector<2x32xf32>, vector<32x128xf32>, vector<2x128xf32> -> vector<2x128xf32>
    %c2 = arith.constant 2 : index
    %c0_29 = arith.constant 0 : index
    %87 = vector.load %arg5[%c2, %c0_29] : memref<3x128xf32, #tpu.memory_space<vmem>>, vector<1x128xf32>
    %88 = vector.broadcast %87 : vector<1x128xf32> to vector<2x128xf32>
    %89 = arith.addf %86, %88 : vector<2x128xf32>
    %c0_30 = arith.constant 0 : index
    %c0_31 = arith.constant 0 : index
    %90 = vector.load %arg6[%c0_30, %c0_31] : memref<2x128xf32, #tpu.memory_space<vmem>>, vector<2x128xf32>
    tpu.vector_store %arg6[%c0_30, %c0_31], %89 {strides = array<i32>} : memref<2x128xf32, #tpu.memory_space<vmem>>, vector<2x128xf32>,
    return
  }
  func.func @transform_0(%arg0: i32) -> (i32, i32) {
    %c0_i32 = arith.constant 0 : i32
    %c0_i32_0 = arith.constant 0 : i32
    return %arg0, %c0_i32 : i32, i32
  }
  func.func @transform_1(%arg0: i32) -> (i32, i32) {
    %c0_i32 = arith.constant 0 : i32
    %c0_i32_0 = arith.constant 0 : i32
    %c0_i32_1 = arith.constant 0 : i32
    return %c0_i32, %c0_i32_0 : i32, i32
  }
  func.func @transform_2(%arg0: i32) -> (i32, i32) {
    %c0_i32 = arith.constant 0 : i32
    %c0_i32_0 = arith.constant 0 : i32
    %c0_i32_1 = arith.constant 0 : i32
    return %c0_i32, %c0_i32_0 : i32, i32
  }
  func.func @transform_3(%arg0: i32) -> (i32, i32) {
    %c0_i32 = arith.constant 0 : i32
    %c0_i32_0 = arith.constant 0 : i32
    %c0_i32_1 = arith.constant 0 : i32
    return %c0_i32, %c0_i32_0 : i32, i32
  }
  func.func @transform_4(%arg0: i32) -> (i32, i32) {
    %c0_i32 = arith.constant 0 : i32
    %c0_i32_0 = arith.constant 0 : i32
    %c0_i32_1 = arith.constant 0 : i32
    return %c0_i32, %c0_i32_0 : i32, i32
  }
  func.func @transform_5(%arg0: i32) -> (i32, i32) {
    %c0_i32 = arith.constant 0 : i32
    %c0_i32_0 = arith.constant 0 : i32
    return %arg0, %c0_i32 : i32, i32
  }
}

</mosaic_0001>

<llo_original>
// kernel: tpu_custom_call.1
$region0: #{tpu_custom_call.1}
  #allocation0 [shape = 'u32[]', space=smem, size = 0x4, offset = 0x4, fixed_abs, tag = 'smem constant byte address 0x4 - core index']
  #allocation1 [shape = 'u32[144,128]{1,0:T(1,128)}', space=vmem, size = 0x12000, scoped, tag = 'internal scratch']
  %s0 = inlined_call_operand.vmem [shape: bf16[16,8], index: 0, kind: input, shape index: {}]
  %s1 = inlined_call_operand.vmem [shape: bf16[12,128], index: 1, kind: input, shape index: {}]
  %s2 = inlined_call_operand.vmem [shape: bf16[96,64], index: 2, kind: input, shape index: {}]
  %s3 = inlined_call_operand.vmem [shape: f32[32,128], index: 3, kind: input, shape index: {}]
  %s4 = inlined_call_operand.vmem [shape: f32[3,128], index: 4, kind: input, shape index: {}]
  %s5 = inlined_call_operand.hbm [shape: f32[2,128], index: 5, kind: output, shape index: {}]
  %s6 = sld [smem:[#allocation0]]
  $region30: #{tpu_custom_call.1} parent=0
    _
  %s8 = ssub.s32 1, %s6
  %s9 = scalar_select 0, %s8, %s6
  $region1: #{tpu_custom_call.1} parent=0
    #allocation2 [shape = 'u8[1024]{0}', space=vmem, size = 0x400, scoped, tag = 'output window, operand 0, single buffered']
    #allocation3 [shape = 's32[1]{0}', space=sflag, size = 0x4, scoped, tag = 'scoped memory for tpu_custom_call.1']
    %10 = vsyncpa [#allocation3], 0
    // Predicated region
    $region2: #{tpu_custom_call.1} parent=1 // pred_check
      _
    $region3: #{tpu_custom_call.1} parent=1 // pred_check_branch
      %12 = sbr.rel (0) target = $region5
    $region4: #{tpu_custom_call.1} parent=1 // pred_region
      _
    $region5: #{tpu_custom_call.1} parent=1 // pred_fallthru
      _
    // Predicated region
    $region6: #{tpu_custom_call.1} parent=1 // pred_check
      _
    $region7: #{tpu_custom_call.1} parent=1 // pred_check_branch
      %14 = sbr.rel (0) target = $region9
    $region8: #{tpu_custom_call.1} parent=1 // pred_region
      _
    $region9: #{tpu_custom_call.1} parent=1 // pred_fallthru
      _
    // Predicated region
    $region10: #{tpu_custom_call.1} parent=1 // pred_check
      _
    $region11: #{tpu_custom_call.1} parent=1 // pred_check_branch
      %16 = sbr.rel (0) target = $region13
    $region12: #{tpu_custom_call.1} parent=1 // pred_region
      _
    $region13: #{tpu_custom_call.1} parent=1 // pred_fallthru
      _
    // Predicated region
    $region14: #{tpu_custom_call.1} parent=1 // pred_check
      _
    $region15: #{tpu_custom_call.1} parent=1 // pred_check_branch
      %18 = sbr.rel (0) target = $region17
    $region16: #{tpu_custom_call.1} parent=1 // pred_region
      _
    $region17: #{tpu_custom_call.1} parent=1 // pred_fallthru
      _
    // Predicated region
    $region18: #{tpu_custom_call.1} parent=1 // pred_check
      _
    $region19: #{tpu_custom_call.1} parent=1 // pred_check_branch
      %20 = sbr.rel (0) target = $region21
    $region20: #{tpu_custom_call.1} parent=1 // pred_region
      _
    $region21: #{tpu_custom_call.1} parent=1 // pred_fallthru
      _
    %v22 = vlaneseq
    %v23 = vshrl.u32 %v22, 7
    %v24 = vadd.s32 %v23, 8
    %vm25 = vcmp.lt.s32.totalorder %v23, 0
    %v26 = vsub.s32 0, %v23
    %v27 = vsel %vm25, %v26, %v23
    %v28 = vshrl.u32 %v27, 3
    %v29 = vand.u32 %v27, 7
    %v30 = vsub.s32 0, %v29
    %v31 = vsel %vm25, %v30, %v29
    %vm32 = vcmp.lt.s32.totalorder %v24, 0
    %v33 = vsub.s32 0, %v24
    %v34 = vsel %vm32, %v33, %v24
    %v35 = vshrl.u32 %v34, 3
    %v36 = vand.u32 %v34, 7
    %v37 = vsub.s32 0, %v36
    %v38 = vsel %vm32, %v37, %v36
    %vm39 = vcmp.ne.s32.totalorder %v31, 0
    %vm40 = vcmp.ne.s32.totalorder %v38, 0
    %vm41 = vcmp.lt.s32.totalorder %v31, 0
    %vm42 = vcmp.lt.s32.totalorder %v38, 0
    %vm43 = vmand %vm41, %vm39
    %vm44 = vmand %vm42, %vm40
    %v45 = vadd.s32 %v31, 8
    %v46 = vadd.s32 %v38, 8
    %v47 = vsel %vm43, %v45, %v31
    %v48 = vsel %vm44, %v46, %v38
    %vm49 = vcmp.eq.s32.totalorder %v47, 0
    %vm50 = vcmp.eq.s32.totalorder %v48, 0
    %vm51 = vcmp.eq.s32.totalorder %v47, 7
    %vm52 = vcmp.eq.s32.totalorder %v48, 7
    %v53 = vld [vmem:[%s0] sm:$0xf]
    %v54 = vld [vmem:[%s0 + $0x4] sm:$0xf]
    %v55 = vunpack.c.l.bf16 %v53
    %v56 = vunpack.c.l.bf16 %v54
    %v57 = vrot.slane %v55, 7
    %v58 = vrot.slane %v56, 7
    %vm59 = vcmp.lt.s32.totalorder %v23, 1
    %v60 = vsel %vm59, %v57, %v58
    %v61 = vsel %vm59, %v58, %v57
    %v62 = vsel %vm49, 0.0, %v61
    %v63 = vsel %vm50, 0.0, %v60
    %v64 = vrot.slane %v55, 1
    %v65 = vrot.slane %v56, 1
    %vm66 = vcmp.lt.s32.totalorder %v23, 7
    %v67 = vsel %vm66, %v64, %v65
    %v68 = vsel %vm66, %v65, %v64
    %v69 = vsel %vm51, 0.0, %v67
    %v70 = vsel %vm52, 0.0, %v68
    %73 = vrot.lane.b32.xlu0 %v62, 122
    %v74 = vpop.permute.xlu0 %73
    %75 = vrot.lane.b32.xlu0 %v63, 122
    %v76 = vpop.permute.xlu0 %75
    %81 = vrot.lane.b32.xlu0 %v55, 2
    %v82 = vpop.permute.xlu0 %81
    %83 = vrot.lane.b32.xlu0 %v56, 2
    %v84 = vpop.permute.xlu0 %83
    %89 = vrot.lane.b32.xlu0 %v69, 10
    %v90 = vpop.permute.xlu0 %89
    %91 = vrot.lane.b32.xlu0 %v70, 10
    %v92 = vpop.permute.xlu0 %91
    %vm95 = vcmask 15360
    %v96 = vsel %vm95, %v74, %v82
    %v97 = vsel %vm95, %v76, %v84
    %vm98 = vcmask 80896
    %v99 = vsel %vm98, %v96, %v90
    %v100 = vsel %vm98, %v97, %v92
    %v101 = vpack.c.bf16 %v100, %v99
    %v102 = vld [vmem:[%s1] sm:$0xf]
    %v103 = vld [vmem:[%s1 + $0x4] sm:$0x3]
    %v104 = vld [vmem:[%s4] sm:$0x1]
    %v105 = vlaneseq
    %v106 = vshrl.u32 %v105, 7
    %v107 = vsub.s32 0, %v106
    %v108 = vrot.slane %v104, %v107
    %v111 = vunpack.c.l.b16 %v102
    %v112 = vunpack.c.l.b16 %v103
    %v113 = vpack.c.b16 %v112, %v111
    %vm114 = vcmask 97280
    %v116 = vsel %vm114, %v101, 0
    %vm118 = vcmask 1045504
    %v120 = vsel %vm118, %v113, 0
    %122 = vmatprep.subr.bf16.mxu0 0
    %123 = vmatpush1.bf16.msra.mxu0 0
    %124 = vmatprep.subr.bf16.mxu0 0
    %125 = vmatpush1.bf16.msra.mxu0 0
    %126 = vmatprep.subr.bf16.mxu0 0
    %127 = vmatpush1.bf16.msra.mxu0 0
    %128 = vmatprep.subr.bf16.mxu0 0
    %129 = vmatpush1.bf16.msra.mxu0 0
    %130 = vmatprep.subr.bf16.mxu0 0
    %131 = vmatpush1.bf16.msra.mxu0 0
    %132 = vmatprep.subr.bf16.mxu0 0
    %133 = vmatpush1.bf16.msra.mxu0 0
    %134 = vmatprep.subr.bf16.mxu0 0
    %135 = vmatpush1.bf16.msra.mxu0 0
    %136 = vmatprep.subr.bf16.mxu0 0
    %137 = vmatpush1.bf16.msra.mxu0 %v120
    %138 = vmatprep.subr.bf16.mxu0 0
    %139 = vmatpush2.bf16.msra.mxu0 0
    %140 = vmatprep.subr.bf16.mxu0 0
    %141 = vmatpush2.bf16.msra.mxu0 0
    %142 = vmatprep.subr.bf16.mxu0 0
    %143 = vmatpush2.bf16.msra.mxu0 0
    %144 = vmatprep.subr.bf16.mxu0 0
    %145 = vmatpush2.bf16.msra.mxu0 0
    %146 = vmatprep.subr.bf16.mxu0 0
    %147 = vmatpush2.bf16.msra.mxu0 0
    %148 = vmatprep.subr.bf16.mxu0 0
    %149 = vmatpush2.bf16.msra.mxu0 0
    %150 = vmatprep.subr.bf16.mxu0 0
    %151 = vmatpush2.bf16.msra.mxu0 0
    %152 = vmatprep.subr.bf16.mxu0 0
    %153 = vmatpush2.bf16.msra.mxu0 0
    %154 = vmatprep.mubr.bf16.mxu0 0
    %155 = vmatmul.mubr.bf16.gmra.mxu0 %v116
    %v156 = vpop.f32.mrf.mxu0
    %v157 = vadd.f32 %v108, %v156
    %v158 = vpop.f32.mrf.mxu0
    %v159 = vpop.f32.mrf.mxu0
    %v160 = vadd.f32 %v108, %v159
    %v161 = vpop.f32.mrf.mxu0
    %162 = vdwg.mxu0
    %v163 = vmax.f32 %v157, 0.0
    %v164 = vmax.f32 %v160, 0.0
    %167 = vrot.lane.b32.xlu0 %v163, 112
    %v168 = vpop.permute.xlu0 %167
    %169 = vrot.lane.b32.xlu0 %v164, 112
    %v170 = vpop.permute.xlu0 %169
    %v173 = vmax.f32 %v163, %v168
    %v174 = vmax.f32 %v164, %v170
    %177 = vrot.lane.b32.xlu0 %v173, 96
    %v178 = vpop.permute.xlu0 %177
    %179 = vrot.lane.b32.xlu0 %v174, 96
    %v180 = vpop.permute.xlu0 %179
    %v183 = vmax.f32 %v173, %v178
    %v184 = vmax.f32 %v174, %v180
    %187 = vrot.lane.b32.xlu0 %v183, 80
    %v188 = vpop.permute.xlu0 %187
    %189 = vrot.lane.b32.xlu0 %v184, 80
    %v190 = vpop.permute.xlu0 %189
    %vm193 = vcmask 130048
    %v194 = vsel %vm193, %v183, %v188
    %v195 = vsel %vm193, %v184, %v190
    %v196 = vrot.slane %v194, 7
    %v197 = vrot.slane %v195, 7
    %v198 = vsel %vm59, %v196, %v197
    %v199 = vsel %vm59, %v197, %v196
    %v200 = vsel %vm49, 0.0, %v199
    %v201 = vsel %vm50, 0.0, %v198
    %v202 = vrot.slane %v194, 1
    %v203 = vrot.slane %v195, 1
    %v204 = vsel %vm66, %v202, %v203
    %v205 = vsel %vm66, %v203, %v202
    %v206 = vsel %vm51, 0.0, %v204
    %v207 = vsel %vm52, 0.0, %v205
    %210 = vrot.lane.b32.xlu0 %v194, 32
    %v211 = vpop.permute.xlu0 %210
    %212 = vrot.lane.b32.xlu0 %v195, 32
    %v213 = vpop.permute.xlu0 %212
    %218 = vrot.lane.b32.xlu0 %v206, 64
    %v219 = vpop.permute.xlu0 %218
    %220 = vrot.lane.b32.xlu0 %v207, 64
    %v221 = vpop.permute.xlu0 %220
    %vm224 = vcmask 261120
    %v225 = vsel %vm224, %v200, %v211
    %v226 = vsel %vm224, %v201, %v213
    %vm227 = vcmask 523264
    %v228 = vsel %vm227, %v225, %v219
    %v229 = vsel %vm227, %v226, %v221
    %v230 = vpack.c.bf16 %v229, %v228
    %v231 = vld [vmem:[%s2] sm:$0xf]
    %v232 = vld [vmem:[%s2 + $0x4] sm:$0xf]
    %v233 = vld [vmem:[%s2 + $0x8] sm:$0xf]
    %v234 = vld [vmem:[%s2 + $0xc] sm:$0xf]
    %v235 = vld [vmem:[%s2 + $0x10] sm:$0xf]
    %v236 = vld [vmem:[%s2 + $0x14] sm:$0xf]
    %v237 = vld [vmem:[%s2 + $0x18] sm:$0xf]
    %v238 = vld [vmem:[%s2 + $0x1c] sm:$0xf]
    %v239 = vld [vmem:[%s2 + $0x20] sm:$0xf]
    %v240 = vld [vmem:[%s2 + $0x24] sm:$0xf]
    %v241 = vld [vmem:[%s2 + $0x28] sm:$0xf]
    %v242 = vld [vmem:[%s2 + $0x2c] sm:$0xf]
    %v243 = vld [vmem:[%s4 + $0x1] sm:$0x1]
    %v244 = vlaneseq
    %v245 = vshrl.u32 %v244, 7
    %v246 = vsub.s32 0, %v245
    %v247 = vrot.slane %v243, %v246
    %v260 = vunpack.c.l.b16 %v231
    %v261 = vunpack.c.l.b16 %v232
    %v262 = vunpack.c.l.b16 %v233
    %v263 = vunpack.c.l.b16 %v234
    %v264 = vunpack.c.l.b16 %v235
    %v265 = vunpack.c.l.b16 %v236
    %v266 = vunpack.c.l.b16 %v237
    %v267 = vunpack.c.l.b16 %v238
    %v268 = vunpack.c.l.b16 %v239
    %v269 = vunpack.c.l.b16 %v240
    %v270 = vunpack.c.l.b16 %v241
    %v271 = vunpack.c.l.b16 %v242
    %v272 = vpack.c.b16 %v261, %v260
    %v273 = vpack.c.b16 %v263, %v262
    %v274 = vpack.c.b16 %v265, %v264
    %v275 = vpack.c.b16 %v267, %v266
    %v276 = vpack.c.b16 %v269, %v268
    %v277 = vpack.c.b16 %v271, %v270
    %vm284 = vcmask 785408
    %v286 = vsel %vm284, %v230, 0
    %288 = vmatprep.subr.bf16.mxu0 0
    %289 = vmatpush1.bf16.msra.mxu0 0
    %290 = vmatprep.subr.bf16.mxu0 0
    %291 = vmatpush1.bf16.msra.mxu0 0
    %292 = vmatprep.subr.bf16.mxu0 0
    %293 = vmatpush1.bf16.msra.mxu0 %v277
    %294 = vmatprep.subr.bf16.mxu0 0
    %295 = vmatpush1.bf16.msra.mxu0 %v276
    %296 = vmatprep.subr.bf16.mxu0 0
    %297 = vmatpush1.bf16.msra.mxu0 %v275
    %298 = vmatprep.subr.bf16.mxu0 0
    %299 = vmatpush1.bf16.msra.mxu0 %v274
    %300 = vmatprep.subr.bf16.mxu0 0
    %301 = vmatpush1.bf16.msra.mxu0 %v273
    %302 = vmatprep.subr.bf16.mxu0 0
    %303 = vmatpush1.bf16.msra.mxu0 %v272
    %304 = vmatprep.subr.bf16.mxu0 0
    %305 = vmatpush2.bf16.msra.mxu0 0
    %306 = vmatprep.subr.bf16.mxu0 0
    %307 = vmatpush2.bf16.msra.mxu0 0
    %308 = vmatprep.subr.bf16.mxu0 0
    %309 = vmatpush2.bf16.msra.mxu0 0
    %310 = vmatprep.subr.bf16.mxu0 0
    %311 = vmatpush2.bf16.msra.mxu0 0
    %312 = vmatprep.subr.bf16.mxu0 0
    %313 = vmatpush2.bf16.msra.mxu0 0
    %314 = vmatprep.subr.bf16.mxu0 0
    %315 = vmatpush2.bf16.msra.mxu0 0
    %316 = vmatprep.subr.bf16.mxu0 0
    %317 = vmatpush2.bf16.msra.mxu0 0
    %318 = vmatprep.subr.bf16.mxu0 0
    %319 = vmatpush2.bf16.msra.mxu0 0
    %320 = vmatprep.mubr.bf16.mxu0 0
    %321 = vmatmul.mubr.bf16.gmra.mxu0 %v286
    %v322 = vpop.f32.mrf.mxu0
    %v323 = vadd.f32 %v247, %v322
    %v324 = vpop.f32.mrf.mxu0
    %v325 = vpop.f32.mrf.mxu0
    %v326 = vadd.f32 %v247, %v325
    %v327 = vpop.f32.mrf.mxu0
    %328 = vdwg.mxu0
    %v329 = vmax.f32 %v323, 0.0
    %v330 = vmax.f32 %v326, 0.0
    %v331 = vsel %vm227, %v329, 0.0
    %v332 = vrot.slane %v331, 4
    %v333 = vadd.f32 %v331, %v332
    %v334 = vrot.slane %v333, 2
    %v335 = vadd.f32 %v333, %v334
    %v336 = vrot.slane %v335, 1
    %v337 = vadd.f32 %v335, %v336
    %v338 = vsel %vm227, %v330, 0.0
    %v339 = vrot.slane %v338, 4
    %v340 = vadd.f32 %v338, %v339
    %v341 = vrot.slane %v340, 2
    %v342 = vadd.f32 %v340, %v341
    %v343 = vrot.slane %v342, 1
    %v344 = vadd.f32 %v342, %v343
    %347 = vrot.lane.b32.xlu0 %v337, 96
    %v348 = vpop.permute.xlu0 %347
    %349 = vrot.lane.b32.xlu0 %v344, 96
    %v350 = vpop.permute.xlu0 %349
    %v353 = vadd.f32 %v337, %v348
    %v354 = vadd.f32 %v344, %v350
    %v355 = vmul.f32 %v353, 0.0625
    %v356 = vmul.f32 %v354, 0.0625
    %v357 = vld [vmem:[%s3] sm:$0xff]
    %v358 = vld [vmem:[%s3 + $0x8] sm:$0xff]
    %v359 = vld [vmem:[%s3 + $0x10] sm:$0xff]
    %v360 = vld [vmem:[%s3 + $0x18] sm:$0xff]
    %v361 = vld [vmem:[%s4 + $0x2] sm:$0x1]
    %v362 = vlaneseq
    %v363 = vshrl.u32 %v362, 7
    %v364 = vsub.s32 0, %v363
    %v365 = vrot.slane %v361, %v364
    %v368 = vrot.slane %v356, 7
    %vm369 = vcmask 1041409
    %v370 = vsel %vm369, %v368, %v355
    %v371 = vsel %vm224, %v370, 0
    %373 = vmatprep.subr.mxu0 0.0
    %374 = vmatpush1.msra.mxu0 0.0
    %375 = vmatprep.subr.mxu0 0.0
    %376 = vmatpush1.msra.mxu0 0.0
    %377 = vmatprep.subr.mxu0 0.0
    %378 = vmatpush1.msra.mxu0 0.0
    %379 = vmatprep.subr.mxu0 0.0
    %380 = vmatpush1.msra.mxu0 0.0
    %381 = vmatprep.subr.mxu0 0.0
    %382 = vmatpush1.msra.mxu0 0.0
    %383 = vmatprep.subr.mxu0 0.0
    %384 = vmatpush1.msra.mxu0 0.0
    %385 = vmatprep.subr.mxu0 0.0
    %386 = vmatpush1.msra.mxu0 0.0
    %387 = vmatprep.subr.mxu0 0.0
    %388 = vmatpush1.msra.mxu0 0.0
    %389 = vmatprep.subr.mxu0 0.0
    %390 = vmatpush1.msra.mxu0 0.0
    %391 = vmatprep.subr.mxu0 0.0
    %392 = vmatpush1.msra.mxu0 0.0
    %393 = vmatprep.subr.mxu0 0.0
    %394 = vmatpush1.msra.mxu0 0.0
    %395 = vmatprep.subr.mxu0 0.0
    %396 = vmatpush1.msra.mxu0 0.0
    %397 = vmatprep.subr.mxu0 0.0
    %398 = vmatpush1.msra.mxu0 %v360
    %399 = vmatprep.subr.mxu0 0.0
    %400 = vmatpush1.msra.mxu0 %v359
    %401 = vmatprep.subr.mxu0 0.0
    %402 = vmatpush1.msra.mxu0 %v358
    %403 = vmatprep.subr.mxu0 0.0
    %404 = vmatpush1.msra.mxu0 %v357
    %405 = vmatprep.subr.mxu0 0.0
    %406 = vmatpush2.msra.mxu0 0.0
    %407 = vmatprep.subr.mxu0 0.0
    %408 = vmatpush2.msra.mxu0 0.0
    %409 = vmatprep.subr.mxu0 0.0
    %410 = vmatpush2.msra.mxu0 0.0
    %411 = vmatprep.subr.mxu0 0.0
    %412 = vmatpush2.msra.mxu0 0.0
    %413 = vmatprep.subr.mxu0 0.0
    %414 = vmatpush2.msra.mxu0 0.0
    %415 = vmatprep.subr.mxu0 0.0
    %416 = vmatpush2.msra.mxu0 0.0
    %417 = vmatprep.subr.mxu0 0.0
    %418 = vmatpush2.msra.mxu0 0.0
    %419 = vmatprep.subr.mxu0 0.0
    %420 = vmatpush2.msra.mxu0 0.0
    %421 = vmatprep.subr.mxu0 0.0
    %422 = vmatpush2.msra.mxu0 0.0
    %423 = vmatprep.subr.mxu0 0.0
    %424 = vmatpush2.msra.mxu0 0.0
    %425 = vmatprep.subr.mxu0 0.0
    %426 = vmatpush2.msra.mxu0 0.0
    %427 = vmatprep.subr.mxu0 0.0
    %428 = vmatpush2.msra.mxu0 0.0
    %429 = vmatprep.subr.mxu0 0.0
    %430 = vmatpush2.msra.mxu0 0.0
    %431 = vmatprep.subr.mxu0 0.0
    %432 = vmatpush2.msra.mxu0 0.0
    %433 = vmatprep.subr.mxu0 0.0
    %434 = vmatpush2.msra.mxu0 0.0
    %435 = vmatprep.subr.mxu0 0.0
    %436 = vmatpush2.msra.mxu0 0.0
    %437 = vmatprep.mubr.f32.mxu0 0.0
    %438 = vmatmul.mubr.f32.gmra.mxu0 %v371
    %v439 = vpop.f32.mrf.mxu0
    %v440 = vadd.f32 %v365, %v439
    %v441 = vpop.f32.mrf.mxu0
    %442 = vdwg.mxu0
    %443 = vst [vmem:[#allocation2] sm:$0x3] %v440
    // Predicated region
    $region22: #{tpu_custom_call.1} parent=1 // pred_check
      _
    $region23: #{tpu_custom_call.1} parent=1 // pred_check_branch
      %445 = sbr.rel (0) target = $region25
    $region24: #{tpu_custom_call.1} parent=1 // pred_region
      %s447 = ssub.s32 32, 32
      %448 = vsyncadd [#allocation3], %s447
      %s450 = sshll.u32 [#allocation2], 4
      %s451 = int_to_ptr.vmem [resolvable:$true] %s450
      %453 = dma.vmem_to_hbm [thread:$0]  %s451, 32, %s5, [#allocation3]
    $region25: #{tpu_custom_call.1} parent=1 // pred_fallthru
      _
    // Predicated region
    $region26: #{tpu_custom_call.1} parent=1 // pred_check
      _
    $region27: #{tpu_custom_call.1} parent=1 // pred_check_branch
      %455 = sbr.rel (0) target = $region29
    $region28: #{tpu_custom_call.1} parent=1 // pred_region
      %456 = dma.done [#allocation3], 32
    $region29: #{tpu_custom_call.1} parent=1 // pred_fallthru
      _
    %457 = vsyncpa [#allocation3], 1

</llo_original>
